<compile_context>
chip_gen: v7x
topology: tpu7x:2x2x1
jax: 0.10.0
libtpu: 0.0.40
codegen_flags: <defaults>
</compile_context>

<pallas_src>
import functools

import jax
import jax.numpy as jnp
from jax.experimental import pallas as pl
from jax.experimental.pallas import tpu as pltpu

LANE = 128            # hidden width padded to the 128-lane vreg width
SUBLANE = 8           # f32 sublane width: batch padded to a multiple of this
HEAD_PAD = 8          # fused [policy | value] head padded to 8 lanes (narrow out)
MAX_TILE = 1024       # largest batch tile (rows) per grid step
MIN_TILE = 256        # smallest "large batch" tile
SMALL_BATCH_XLA = 64  # batch <= this -> plain XLA path (latency-bound regime)


def _round_up(x, m):
    return (x + m - 1) // m * m


def _ac_kernel(x_ref, w1_ref, b1_ref, w2_ref, b2_ref, wh_ref, bh_ref, out_ref):
    """Fused actor-critic MLP tile.

    h1  = relu(x @ W1 + b1)
    h2  = relu(h1 @ W2 + b2)
    out = h2 @ W_head + b_head        # W_head = [fc_policy | fc_value | 0-pad]
    """
    x = x_ref[...].astype(jnp.bfloat16)  # bf16 MXU feed, f32 accumulation

    h1 = jnp.dot(x, w1_ref[...], preferred_element_type=jnp.float32) + b1_ref[...]
    h1 = jnp.maximum(h1, 0.0)

    h2 = jnp.dot(h1.astype(jnp.bfloat16), w2_ref[...],
                 preferred_element_type=jnp.float32) + b2_ref[...]
    h2 = jnp.maximum(h2, 0.0)

    out = jnp.dot(h2.astype(jnp.bfloat16), wh_ref[...],
                  preferred_element_type=jnp.float32) + bh_ref[...]
    out_ref[...] = out.astype(out_ref.dtype)


def prepare_params(raw):
    """Pad hidden width to 128 lanes, fuse policy+value heads into a NARROW
    (output_dim+1 -> multiple of 8) head, cast weights to bf16 (biases f32).
    Done once outside the kernel."""
    in_dim, hidden = raw["w1"].shape
    output_dim = raw["wp"].shape[1]
    hp = _round_up(hidden, LANE)
    head_p = _round_up(output_dim + 1, HEAD_PAD)   # [policy | value | zeros]

    def pad2(a, rows, cols):
        return jnp.pad(a, ((0, rows - a.shape[0]), (0, cols - a.shape[1])))

    wh_raw = jnp.concatenate([raw["wp"], raw["wv"]], axis=1)
    bh_raw = jnp.concatenate([raw["bp"], raw["bv"]], axis=1)

    return {
        "w1": pad2(raw["w1"], in_dim, hp).astype(jnp.bfloat16),
        "b1": pad2(raw["b1"], 1, hp).astype(jnp.float32),
        "w2": pad2(raw["w2"], hp, hp).astype(jnp.bfloat16),
        "b2": pad2(raw["b2"], 1, hp).astype(jnp.float32),
        "wh": pad2(wh_raw, hp, head_p).astype(jnp.bfloat16),
        "bh": pad2(bh_raw, 1, head_p).astype(jnp.float32),
    }


def _choose_batch_tiling(batch):
    """Pick (tile_rows, padded_rows).

    Prefer the largest tile that (a) yields >= 2 grid steps (so the "parallel"
    batch axis engages both TensorCores on v7x) and (b) wastes <= ~12.5% of
    DMA/MXU work on zero-padded rows.  Otherwise fall back to the minimum-waste
    option (ties go to the larger tile -> fewer fixed-cost grid steps)."""
    b8 = _round_up(max(batch, SUBLANE), SUBLANE)
    if b8 <= MIN_TILE:
        return b8, b8                                  # tiny batch: one tile

    candidates = [MAX_TILE, MAX_TILE // 2, MIN_TILE]
    if b8 <= MAX_TILE and b8 not in candidates:
        candidates.append(b8)                          # exact single-tile fit

    def plan(tb):
        pb = _round_up(b8, tb)
        return pb, (pb - batch) / pb

    for tb in (MAX_TILE, MAX_TILE // 2, MIN_TILE):
        pb, waste = plan(tb)
        if pb // tb >= 2 and waste <= 0.125:
            return tb, pb

    tb = min(candidates, key=lambda t: (plan(t)[1], -t))
    return tb, plan(tb)[0]


def _dense_forward(x, params):
    """Plain-XLA path for tiny (latency-bound) batches where pallas_call launch
    and padding overhead dominate.  Same math as _ac_kernel."""
    h1 = jnp.maximum(
        jnp.dot(x.astype(jnp.bfloat16), params["w1"],
                preferred_element_type=jnp.float32) + params["b1"], 0.0)
    h2 = jnp.maximum(
        jnp.dot(h1.astype(jnp.bfloat16), params["w2"],
                preferred_element_type=jnp.float32) + params["b2"], 0.0)
    return jnp.dot(h2.astype(jnp.bfloat16), params["wh"],
                   preferred_element_type=jnp.float32) + params["bh"]


@functools.partial(jax.jit, static_argnames=("output_dim",))
def actor_critic_forward(x, params, *, output_dim):
    """Fused forward pass. Returns (policy_logits (B, output_dim), value (B, 1))."""
    x = jnp.asarray(x, jnp.float32)
    batch, in_dim = x.shape
    hp = params["w1"].shape[1]
    head_p = params["wh"].shape[1]

    if batch <= SMALL_BATCH_XLA:
        out = _dense_forward(x, params)
    else:
        tb, pb = _choose_batch_tiling(batch)
        if pb != batch:
            # Zero rows are sliced off below; they never feed sampling/argmax.
            x = jnp.pad(x, ((0, pb - batch), (0, 0)))

        grid = (pb // tb,)
        flops = 2 * pb * (in_dim * hp + hp * hp + hp * head_p)
        bytes_accessed = (
            pb * in_dim * 4                                   # x (f32 in)
            + pb * head_p * 4                                 # narrow head out (f32)
            + (in_dim * hp + hp * hp + hp * head_p) * 2       # bf16 weights
            + (2 * hp + head_p) * 4                           # f32 biases
        )

        out = pl.pallas_call(
            _ac_kernel,
            out_shape=jax.ShapeDtypeStruct((pb, head_p), jnp.float32),
            grid=grid,
            in_specs=[
                pl.BlockSpec((tb, in_dim), lambda i: (i, 0)),   # x: tiled on batch
                pl.BlockSpec((in_dim, hp), lambda i: (0, 0)),   # weights/biases stay
                pl.BlockSpec((1, hp), lambda i: (0, 0)),        # VMEM-resident across
                pl.BlockSpec((hp, hp), lambda i: (0, 0)),       # all grid steps
                pl.BlockSpec((1, hp), lambda i: (0, 0)),
                pl.BlockSpec((hp, head_p), lambda i: (0, 0)),
                pl.BlockSpec((1, head_p), lambda i: (0, 0)),
            ],
            out_specs=pl.BlockSpec((tb, head_p), lambda i: (i, 0)),  # narrow out
            compiler_params=pltpu.CompilerParams(
                dimension_semantics=("parallel",)),                  # megacore v7x
            cost_estimate=pl.CostEstimate(
                flops=flops, bytes_accessed=bytes_accessed, transcendentals=0),
        )(x, params["w1"], params["b1"], params["w2"], params["b2"],
          params["wh"], params["bh"])

    policy_logits = out[:batch, :output_dim]
    value = out[:batch, output_dim:output_dim + 1]
    return policy_logits, value


def actor_critic_act(key, obses, params, *, output_dim):
    """Equivalent of ActorCriticNetwork.act: categorical sample from softmax(policy)."""
    logits, _ = actor_critic_forward(jnp.asarray(obses, jnp.float32),
                                     params, output_dim=output_dim)
    return jax.random.categorical(key, logits, axis=-1)


def actor_critic_evaluate(obses, params, *, output_dim):
    """Equivalent of ActorCriticNetwork.evaluate."""
    return actor_critic_forward(jnp.asarray(obses, jnp.float32),
                                params, output_dim=output_dim)


def init_raw_params(key, input_dim, hidden_dim, output_dim):
    """PyTorch nn.Linear default init (U(-1/sqrt(fan_in), 1/sqrt(fan_in))).
    Weights stored as (in, out) == PyTorch weight.T; biases as (1, out)."""
    def linear(k, fan_in, fan_out):
        kw, kb = jax.random.split(k)
        bound = 1.0 / jnp.sqrt(fan_in)
        w = jax.random.uniform(kw, (fan_in, fan_out), jnp.float32, -bound, bound)
        b = jax.random.uniform(kb, (1, fan_out), jnp.float32, -bound, bound)
        return w, b

    k1, k2, kp, kv = jax.random.split(key, 4)
    w1, b1 = linear(k1, input_dim, hidden_dim)
    w2, b2 = linear(k2, hidden_dim, hidden_dim)
    wp, bp = linear(kp, hidden_dim, output_dim)   # fc_policy
    wv, bv = linear(kv, hidden_dim, 1)            # fc_value
    return {"w1": w1, "b1": b1, "w2": w2, "b2": b2,
            "wp": wp, "bp": bp, "wv": wv, "bv": bv}


def _reference_forward(x, raw):
    """Pure-JAX f32 reference matching the PyTorch module semantics."""
    h1 = jnp.maximum(x @ raw["w1"] + raw["b1"], 0.0)
    h2 = jnp.maximum(h1 @ raw["w2"] + raw["b2"], 0.0)
    return h2 @ raw["wp"] + raw["bp"], h2 @ raw["wv"] + raw["bv"]


if __name__ == "__main__":
    INPUT_DIM, HIDDEN, OUTPUT_DIM = 16, 32, 4

    key = jax.random.PRNGKey(0)
    k_params, k_x_small, k_x_big, k_act = jax.random.split(key, 4)

    raw = init_raw_params(k_params, INPUT_DIM, HIDDEN, OUTPUT_DIM)
    prepped = prepare_params(raw)

    # --- Pallas kernel path (batch > SMALL_BATCH_XLA) ---------------------
    BATCH_BIG = 160
    xb = jax.random.normal(k_x_big, (BATCH_BIG, INPUT_DIM), dtype=jnp.float32)
    logits_b, value_b = jax.block_until_ready(
        actor_critic_forward(xb, prepped, output_dim=OUTPUT_DIM))
    ref_lb, ref_vb = _reference_forward(xb, raw)
    assert logits_b.shape == (BATCH_BIG, OUTPUT_DIM)
    assert value_b.shape == (BATCH_BIG, 1)
    # bf16 weights / MXU feed with f32 accumulation -> bf16-appropriate tolerance.
    assert jnp.allclose(logits_b, ref_lb, atol=3e-2, rtol=3e-2), "policy mismatch"
    assert jnp.allclose(value_b, ref_vb, atol=3e-2, rtol=3e-2), "value mismatch"

    # --- Small-batch XLA fallback path (act() regime) ---------------------
    BATCH_SMALL = 8
    xs = jax.random.normal(k_x_small, (BATCH_SMALL, INPUT_DIM), dtype=jnp.float32)
    logits_s, value_s = jax.block_until_ready(
        actor_critic_forward(xs, prepped, output_dim=OUTPUT_DIM))
    ref_ls, ref_vs = _reference_forward(xs, raw)
    assert logits_s.shape == (BATCH_SMALL, OUTPUT_DIM)
    assert value_s.shape == (BATCH_SMALL, 1)
    assert jnp.allclose(logits_s, ref_ls, atol=3e-2, rtol=3e-2), "policy mismatch (small)"
    assert jnp.allclose(value_s, ref_vs, atol=3e-2, rtol=3e-2), "value mismatch (small)"

    actions = jax.block_until_ready(
        actor_critic_act(k_act, xs, prepped, output_dim=OUTPUT_DIM))
    assert actions.shape == (BATCH_SMALL,)

    # TODO(synk): nn_conf_func is external config; the 2x(Linear+ReLU) backbone is
    # assumed (standard for this repo). Optimizer/loss/save/load are host-side only.
    print("KERNEL_OK")
</pallas_src>

<mosaic_0001>
module attributes {stable_mosaic.version = 11 : i64} {
  func.func @_ac_kernel(%arg0: i32, %arg1: memref<160x16xf32, #tpu.memory_space<vmem>>, %arg2: memref<16x128xbf16, #tpu.memory_space<vmem>>, %arg3: memref<1x128xf32, #tpu.memory_space<vmem>>, %arg4: memref<128x128xbf16, #tpu.memory_space<vmem>>, %arg5: memref<1x128xf32, #tpu.memory_space<vmem>>, %arg6: memref<128x8xbf16, #tpu.memory_space<vmem>>, %arg7: memref<1x8xf32, #tpu.memory_space<vmem>>, %arg8: memref<160x8xf32, #tpu.memory_space<vmem>>) attributes {dimension_semantics = [#tpu.dimension_semantics<parallel>], iteration_bounds = array<i64: 1>, scalar_prefetch = 0 : i64, scratch_operands = 0 : i64, tpu.core_type = #tpu.core_type<tc>, window_params = [{transform_indices = @transform_0, window_bounds = array<i64: 160, 16>}, {pipeline_mode = #tpu.pipeline_mode<synchronous>, transform_indices = @transform_1, window_bounds = array<i64: 16, 128>}, {pipeline_mode = #tpu.pipeline_mode<synchronous>, transform_indices = @transform_2, window_bounds = array<i64: 1, 128>}, {pipeline_mode = #tpu.pipeline_mode<synchronous>, transform_indices = @transform_3, window_bounds = array<i64: 128, 128>}, {pipeline_mode = #tpu.pipeline_mode<synchronous>, transform_indices = @transform_4, window_bounds = array<i64: 1, 128>}, {pipeline_mode = #tpu.pipeline_mode<synchronous>, transform_indices = @transform_5, window_bounds = array<i64: 128, 8>}, {pipeline_mode = #tpu.pipeline_mode<synchronous>, transform_indices = @transform_6, window_bounds = array<i64: 1, 8>}, {transform_indices = @transform_7, window_bounds = array<i64: 160, 8>}]} {
    %c0 = arith.constant 0 : index
    %c0_0 = arith.constant 0 : index
    %0 = vector.load %arg1[%c0, %c0_0] : memref<160x16xf32, #tpu.memory_space<vmem>>, vector<160x16xf32>
    %1 = arith.truncf %0 : vector<160x16xf32> to vector<160x16xbf16>
    %c0_1 = arith.constant 0 : index
    %c0_2 = arith.constant 0 : index
    %2 = vector.load %arg2[%c0_1, %c0_2] : memref<16x128xbf16, #tpu.memory_space<vmem>>, vector<16x128xbf16>
    %cst = arith.constant dense<0.000000e+00> : vector<160x128xf32>
    %3 = tpu.matmul %1, %2, %cst {dimension_numbers = #tpu.dot_dimension_numbers<[1], [0], [0], [1], [0, 0, 1, 1], [], []>} : vector<160x16xbf16>, vector<16x128xbf16>, vector<160x128xf32> -> vector<160x128xf32>
    %c0_3 = arith.constant 0 : index
    %c0_4 = arith.constant 0 : index
    %4 = vector.load %arg3[%c0_3, %c0_4] : memref<1x128xf32, #tpu.memory_space<vmem>>, vector<1x128xf32>
    %5 = vector.broadcast %4 : vector<1x128xf32> to vector<160x128xf32>
    %6 = arith.addf %3, %5 : vector<160x128xf32>
    %cst_5 = arith.constant 0.000000e+00 : f32
    %7 = vector.broadcast %cst_5 : f32 to vector<160x128xf32>
    %8 = arith.maximumf %6, %7 : vector<160x128xf32>
    %9 = arith.truncf %8 : vector<160x128xf32> to vector<160x128xbf16>
    %c0_6 = arith.constant 0 : index
    %c0_7 = arith.constant 0 : index
    %10 = vector.load %arg4[%c0_6, %c0_7] : memref<128x128xbf16, #tpu.memory_space<vmem>>, vector<128x128xbf16>
    %cst_8 = arith.constant dense<0.000000e+00> : vector<160x128xf32>
    %11 = tpu.matmul %9, %10, %cst_8 {dimension_numbers = #tpu.dot_dimension_numbers<[1], [0], [0], [1], [0, 0, 1, 1], [], []>} : vector<160x128xbf16>, vector<128x128xbf16>, vector<160x128xf32> -> vector<160x128xf32>
    %c0_9 = arith.constant 0 : index
    %c0_10 = arith.constant 0 : index
    %12 = vector.load %arg5[%c0_9, %c0_10] : memref<1x128xf32, #tpu.memory_space<vmem>>, vector<1x128xf32>
    %13 = vector.broadcast %12 : vector<1x128xf32> to vector<160x128xf32>
    %14 = arith.addf %11, %13 : vector<160x128xf32>
    %cst_11 = arith.constant 0.000000e+00 : f32
    %15 = vector.broadcast %cst_11 : f32 to vector<160x128xf32>
    %16 = arith.maximumf %14, %15 : vector<160x128xf32>
    %17 = arith.truncf %16 : vector<160x128xf32> to vector<160x128xbf16>
    %c0_12 = arith.constant 0 : index
    %c0_13 = arith.constant 0 : index
    %18 = vector.load %arg6[%c0_12, %c0_13] : memref<128x8xbf16, #tpu.memory_space<vmem>>, vector<128x8xbf16>
    %cst_14 = arith.constant dense<0.000000e+00> : vector<160x8xf32>
    %19 = tpu.matmul %17, %18, %cst_14 {dimension_numbers = #tpu.dot_dimension_numbers<[1], [0], [0], [1], [0, 0, 1, 1], [], []>} : vector<160x128xbf16>, vector<128x8xbf16>, vector<160x8xf32> -> vector<160x8xf32>
    %c0_15 = arith.constant 0 : index
    %c0_16 = arith.constant 0 : index
    %20 = vector.load %arg7[%c0_15, %c0_16] : memref<1x8xf32, #tpu.memory_space<vmem>>, vector<1x8xf32>
    %21 = vector.broadcast %20 : vector<1x8xf32> to vector<160x8xf32>
    %22 = arith.addf %19, %21 : vector<160x8xf32>
    %c0_17 = arith.constant 0 : index
    %c0_18 = arith.constant 0 : index
    %23 = vector.load %arg8[%c0_17, %c0_18] : memref<160x8xf32, #tpu.memory_space<vmem>>, vector<160x8xf32>
    tpu.vector_store %arg8[%c0_17, %c0_18], %22 {strides = array<i32>} : memref<160x8xf32, #tpu.memory_space<vmem>>, vector<160x8xf32>,
    return
  }
  func.func @transform_0(%arg0: i32) -> (i32, i32) {
    %c0_i32 = arith.constant 0 : i32
    %c0_i32_0 = arith.constant 0 : i32
    return %arg0, %c0_i32 : i32, i32
  }
  func.func @transform_1(%arg0: i32) -> (i32, i32) {
    %c0_i32 = arith.constant 0 : i32
    %c0_i32_0 = arith.constant 0 : i32
    %c0_i32_1 = arith.constant 0 : i32
    return %c0_i32, %c0_i32_0 : i32, i32
  }
  func.func @transform_2(%arg0: i32) -> (i32, i32) {
    %c0_i32 = arith.constant 0 : i32
    %c0_i32_0 = arith.constant 0 : i32
    %c0_i32_1 = arith.constant 0 : i32
    return %c0_i32, %c0_i32_0 : i32, i32
  }
  func.func @transform_3(%arg0: i32) -> (i32, i32) {
    %c0_i32 = arith.constant 0 : i32
    %c0_i32_0 = arith.constant 0 : i32
    %c0_i32_1 = arith.constant 0 : i32
    return %c0_i32, %c0_i32_0 : i32, i32
  }
  func.func @transform_4(%arg0: i32) -> (i32, i32) {
    %c0_i32 = arith.constant 0 : i32
    %c0_i32_0 = arith.constant 0 : i32
    %c0_i32_1 = arith.constant 0 : i32
    return %c0_i32, %c0_i32_0 : i32, i32
  }
  func.func @transform_5(%arg0: i32) -> (i32, i32) {
    %c0_i32 = arith.constant 0 : i32
    %c0_i32_0 = arith.constant 0 : i32
    %c0_i32_1 = arith.constant 0 : i32
    return %c0_i32, %c0_i32_0 : i32, i32
  }
  func.func @transform_6(%arg0: i32) -> (i32, i32) {
    %c0_i32 = arith.constant 0 : i32
    %c0_i32_0 = arith.constant 0 : i32
    %c0_i32_1 = arith.constant 0 : i32
    return %c0_i32, %c0_i32_0 : i32, i32
  }
  func.func @transform_7(%arg0: i32) -> (i32, i32) {
    %c0_i32 = arith.constant 0 : i32
    %c0_i32_0 = arith.constant 0 : i32
    return %arg0, %c0_i32 : i32, i32
  }
}

</mosaic_0001>

<llo_original>
// kernel: actor_critic_forward.1
$region0: #{actor_critic_forward.1}
  #allocation0 [shape = 'u32[]', space=smem, size = 0x4, offset = 0x4, fixed_abs, tag = 'smem constant byte address 0x4 - core index']
  #allocation1 [shape = 'u32[144,128]{1,0:T(1,128)}', space=vmem, size = 0x12000, scoped, tag = 'internal scratch']
  %s0 = inlined_call_operand.vmem [shape: f32[160,16], index: 0, kind: input, shape index: {}]
  %s1 = inlined_call_operand.vmem [shape: bf16[16,128], index: 1, kind: input, shape index: {}]
  %s2 = inlined_call_operand.vmem [shape: f32[1,128], index: 2, kind: input, shape index: {}]
  %s3 = inlined_call_operand.vmem [shape: bf16[128,128], index: 3, kind: input, shape index: {}]
  %s4 = inlined_call_operand.vmem [shape: f32[1,128], index: 4, kind: input, shape index: {}]
  %s5 = inlined_call_operand.vmem [shape: bf16[128,8], index: 5, kind: input, shape index: {}]
  %s6 = inlined_call_operand.vmem [shape: f32[1,8], index: 6, kind: input, shape index: {}]
  %s7 = inlined_call_operand.vmem [shape: f32[160,8], index: 7, kind: output, shape index: {}]
  %s8 = sld [smem:[#allocation0]]
  $region38: #{actor_critic_forward.1} parent=0
    _
  %s10 = ssub.s32 1, %s8
  %s11 = scalar_select 0, %s10, %s8
  // Predicated region
  $region2: #{actor_critic_forward.1} parent=0 // pred_check
    _
  $region3: #{actor_critic_forward.1} parent=0 // pred_check_branch
    %13 = sbr.rel (0) target = $region5
  $region4: #{actor_critic_forward.1} parent=0 // pred_region
    _
  $region5: #{actor_critic_forward.1} parent=0 // pred_fallthru
    _
  // Predicated region
  $region6: #{actor_critic_forward.1} parent=0 // pred_check
    _
  $region7: #{actor_critic_forward.1} parent=0 // pred_check_branch
    %15 = sbr.rel (0) target = $region9
  $region8: #{actor_critic_forward.1} parent=0 // pred_region
    _
  $region9: #{actor_critic_forward.1} parent=0 // pred_fallthru
    _
  // Predicated region
  $region10: #{actor_critic_forward.1} parent=0 // pred_check
    _
  $region11: #{actor_critic_forward.1} parent=0 // pred_check_branch
    %17 = sbr.rel (0) target = $region13
  $region12: #{actor_critic_forward.1} parent=0 // pred_region
    _
  $region13: #{actor_critic_forward.1} parent=0 // pred_fallthru
    _
  // Predicated region
  $region14: #{actor_critic_forward.1} parent=0 // pred_check
    _
  $region15: #{actor_critic_forward.1} parent=0 // pred_check_branch
    %19 = sbr.rel (0) target = $region17
  $region16: #{actor_critic_forward.1} parent=0 // pred_region
    _
  $region17: #{actor_critic_forward.1} parent=0 // pred_fallthru
    _
  // Predicated region
  $region18: #{actor_critic_forward.1} parent=0 // pred_check
    _
  $region19: #{actor_critic_forward.1} parent=0 // pred_check_branch
    %21 = sbr.rel (0) target = $region21
  $region20: #{actor_critic_forward.1} parent=0 // pred_region
    _
  $region21: #{actor_critic_forward.1} parent=0 // pred_fallthru
    _
  // Predicated region
  $region22: #{actor_critic_forward.1} parent=0 // pred_check
    _
  $region23: #{actor_critic_forward.1} parent=0 // pred_check_branch
    %23 = sbr.rel (0) target = $region25
  $region24: #{actor_critic_forward.1} parent=0 // pred_region
    _
  $region25: #{actor_critic_forward.1} parent=0 // pred_fallthru
    _
  // Predicated region
  $region26: #{actor_critic_forward.1} parent=0 // pred_check
    _
  $region27: #{actor_critic_forward.1} parent=0 // pred_check_branch
    %25 = sbr.rel (0) target = $region29
  $region28: #{actor_critic_forward.1} parent=0 // pred_region
    _
  $region29: #{actor_critic_forward.1} parent=0 // pred_fallthru
    _
  %v27 = vld [vmem:[%s0] sm:$0xff]
  %v28 = vld [vmem:[%s0 + $0x8] sm:$0xff]
  %v29 = vld [vmem:[%s0 + $0x10] sm:$0xff]
  %v30 = vld [vmem:[%s0 + $0x18] sm:$0xff]
  %v31 = vld [vmem:[%s0 + $0x20] sm:$0xff]
  %v32 = vld [vmem:[%s0 + $0x28] sm:$0xff]
  %v33 = vld [vmem:[%s0 + $0x30] sm:$0xff]
  %v34 = vld [vmem:[%s0 + $0x38] sm:$0xff]
  %v35 = vld [vmem:[%s0 + $0x40] sm:$0xff]
  %v36 = vld [vmem:[%s0 + $0x48] sm:$0xff]
  %v37 = vld [vmem:[%s0 + $0x50] sm:$0xff]
  %v38 = vld [vmem:[%s0 + $0x58] sm:$0xff]
  %v39 = vld [vmem:[%s0 + $0x60] sm:$0xff]
  %v40 = vld [vmem:[%s0 + $0x68] sm:$0xff]
  %v41 = vld [vmem:[%s0 + $0x70] sm:$0xff]
  %v42 = vld [vmem:[%s0 + $0x78] sm:$0xff]
  %v43 = vld [vmem:[%s0 + $0x80] sm:$0xff]
  %v44 = vld [vmem:[%s0 + $0x88] sm:$0xff]
  %v45 = vld [vmem:[%s0 + $0x90] sm:$0xff]
  %v46 = vld [vmem:[%s0 + $0x98] sm:$0xff]
  %v47 = vpack.c.bf16 %v28, %v27
  %v48 = vpack.c.bf16 %v30, %v29
  %v49 = vpack.c.bf16 %v32, %v31
  %v50 = vpack.c.bf16 %v34, %v33
  %v51 = vpack.c.bf16 %v36, %v35
  %v52 = vpack.c.bf16 %v38, %v37
  %v53 = vpack.c.bf16 %v40, %v39
  %v54 = vpack.c.bf16 %v42, %v41
  %v55 = vpack.c.bf16 %v44, %v43
  %v56 = vpack.c.bf16 %v46, %v45
  %v57 = vld [vmem:[%s1] sm:$0xf]
  %v58 = vld [vmem:[%s1 + $0x4] sm:$0xf]
  %v59 = vld [vmem:[%s2] sm:$0x1]
  %v61 = vlaneseq
  %v62 = vshrl.u32 %v61, 7
  %v63 = vsub.s32 0, %v62
  %v64 = vrot.slane %v59, %v63
  %v68 = vunpack.c.l.b16 %v57
  %v69 = vunpack.c.l.b16 %v58
  %v70 = vpack.c.b16 %v69, %v68
  %vm72 = vcmask 130048
  %v74 = vsel %vm72, %v47, 0
  %v77 = vsel %vm72, %v48, 0
  %v80 = vsel %vm72, %v49, 0
  %v83 = vsel %vm72, %v50, 0
  %v86 = vsel %vm72, %v51, 0
  %v89 = vsel %vm72, %v52, 0
  %v92 = vsel %vm72, %v53, 0
  %v95 = vsel %vm72, %v54, 0
  %v98 = vsel %vm72, %v55, 0
  %v101 = vsel %vm72, %v56, 0
  %103 = vmatprep.subr.bf16.mxu0 0
  %104 = vmatpush1.bf16.msra.mxu0 %v70
  %105 = vmatprep.subr.bf16.mxu0 0
  %106 = vmatpush1.bf16.msra.mxu0 0
  %107 = vmatprep.subr.bf16.mxu0 0
  %108 = vmatpush1.bf16.msra.mxu0 0
  %109 = vmatprep.subr.bf16.mxu0 0
  %110 = vmatpush1.bf16.msra.mxu0 0
  %111 = vmatprep.subr.bf16.mxu0 0
  %112 = vmatpush1.bf16.msra.mxu0 0
  %113 = vmatprep.subr.bf16.mxu0 0
  %114 = vmatpush1.bf16.msra.mxu0 0
  %115 = vmatprep.subr.bf16.mxu0 0
  %116 = vmatpush1.bf16.msra.mxu0 0
  %117 = vmatprep.subr.bf16.mxu0 0
  %118 = vmatpush1.bf16.msra.mxu0 0
  %119 = vmatprep.subr.bf16.mxu0 0
  %120 = vmatpush1.bf16.msra.mxu0 0
  %121 = vmatprep.subr.bf16.mxu0 0
  %122 = vmatpush1.bf16.msra.mxu0 0
  %123 = vmatprep.subr.bf16.mxu0 0
  %124 = vmatpush1.bf16.msra.mxu0 0
  %125 = vmatprep.subr.bf16.mxu0 0
  %126 = vmatpush1.bf16.msra.mxu0 0
  %127 = vmatprep.subr.bf16.mxu0 0
  %128 = vmatpush1.bf16.msra.mxu0 0
  %129 = vmatprep.subr.bf16.mxu0 0
  %130 = vmatpush1.bf16.msra.mxu0 0
  %131 = vmatprep.subr.bf16.mxu0 0
  %132 = vmatpush1.bf16.msra.mxu0 0
  %133 = vmatprep.subr.bf16.mxu0 0
  %134 = vmatpush1.bf16.msra.mxu0 0
  %135 = vmatprep.mubr.bf16.mxu0 0
  %136 = vmatmul.mubr.bf16.gmra.mrb[0].mxu0 %v74
  %v137 = vpop.f32.mrb[0].mxu0
  %v138 = vadd.f32 %v64, %v137
  %v139 = vpop.f32.mrb[0].mxu0
  %v140 = vpop.f32.mrb[0].mxu0
  %v141 = vadd.f32 %v64, %v140
  %v142 = vpop.f32.mrb[0].mxu0
  %143 = vmatprep.mubr.bf16.mxu0 0
  %144 = vmatmul.mubr.bf16.gmra.mrb[0].mxu0 %v77
  %v145 = vpop.f32.mrb[0].mxu0
  %v146 = vadd.f32 %v64, %v145
  %v147 = vpop.f32.mrb[0].mxu0
  %v148 = vpop.f32.mrb[0].mxu0
  %v149 = vadd.f32 %v64, %v148
  %v150 = vpop.f32.mrb[0].mxu0
  %151 = vmatprep.mubr.bf16.mxu0 0
  %152 = vmatmul.mubr.bf16.gmra.mrb[0].mxu0 %v80
  %v153 = vpop.f32.mrb[0].mxu0
  %v154 = vadd.f32 %v64, %v153
  %v155 = vpop.f32.mrb[0].mxu0
  %v156 = vpop.f32.mrb[0].mxu0
  %v157 = vadd.f32 %v64, %v156
  %v158 = vpop.f32.mrb[0].mxu0
  %159 = vmatprep.mubr.bf16.mxu0 0
  %160 = vmatmul.mubr.bf16.gmra.mrb[0].mxu0 %v83
  %v161 = vpop.f32.mrb[0].mxu0
  %v162 = vadd.f32 %v64, %v161
  %v163 = vpop.f32.mrb[0].mxu0
  %v164 = vpop.f32.mrb[0].mxu0
  %v165 = vadd.f32 %v64, %v164
  %v166 = vpop.f32.mrb[0].mxu0
  %167 = vmatprep.mubr.bf16.mxu0 0
  %168 = vmatmul.mubr.bf16.gmra.mrb[0].mxu0 %v86
  %v169 = vpop.f32.mrb[0].mxu0
  %v170 = vadd.f32 %v64, %v169
  %v171 = vpop.f32.mrb[0].mxu0
  %v172 = vpop.f32.mrb[0].mxu0
  %v173 = vadd.f32 %v64, %v172
  %v174 = vpop.f32.mrb[0].mxu0
  %175 = vmatprep.mubr.bf16.mxu0 0
  %176 = vmatmul.mubr.bf16.gmra.mrb[0].mxu0 %v89
  %v177 = vpop.f32.mrb[0].mxu0
  %v178 = vadd.f32 %v64, %v177
  %v179 = vpop.f32.mrb[0].mxu0
  %v180 = vpop.f32.mrb[0].mxu0
  %v181 = vadd.f32 %v64, %v180
  %v182 = vpop.f32.mrb[0].mxu0
  %183 = vmatprep.mubr.bf16.mxu0 0
  %184 = vmatmul.mubr.bf16.gmra.mrb[0].mxu0 %v92
  %v185 = vpop.f32.mrb[0].mxu0
  %v186 = vadd.f32 %v64, %v185
  %v187 = vpop.f32.mrb[0].mxu0
  %v188 = vpop.f32.mrb[0].mxu0
  %v189 = vadd.f32 %v64, %v188
  %v190 = vpop.f32.mrb[0].mxu0
  %191 = vmatprep.mubr.bf16.mxu0 0
  %192 = vmatmul.mubr.bf16.gmra.mrb[0].mxu0 %v95
  %v193 = vpop.f32.mrb[0].mxu0
  %v194 = vadd.f32 %v64, %v193
  %v195 = vpop.f32.mrb[0].mxu0
  %v196 = vpop.f32.mrb[0].mxu0
  %v197 = vadd.f32 %v64, %v196
  %v198 = vpop.f32.mrb[0].mxu0
  %199 = vmatprep.mubr.bf16.mxu0 0
  %200 = vmatmul.mubr.bf16.gmra.mrb[0].mxu0 %v98
  %v201 = vpop.f32.mrb[0].mxu0
  %v202 = vadd.f32 %v64, %v201
  %v203 = vpop.f32.mrb[0].mxu0
  %v204 = vpop.f32.mrb[0].mxu0
  %v205 = vadd.f32 %v64, %v204
  %v206 = vpop.f32.mrb[0].mxu0
  %207 = vmatprep.mubr.bf16.mxu0 0
  %208 = vmatmul.mubr.bf16.gmra.mrb[0].mxu0 %v101
  %v209 = vpop.f32.mrb[0].mxu0
  %v210 = vadd.f32 %v64, %v209
  %v211 = vpop.f32.mrb[0].mxu0
  %v212 = vpop.f32.mrb[0].mxu0
  %v213 = vadd.f32 %v64, %v212
  %v214 = vpop.f32.mrb[0].mxu0
  %215 = vdwg.mxu0
  %v216 = vmax.f32 %v138, 0.0
  %v217 = vmax.f32 %v141, 0.0
  %v218 = vmax.f32 %v146, 0.0
  %v219 = vmax.f32 %v149, 0.0
  %v220 = vmax.f32 %v154, 0.0
  %v221 = vmax.f32 %v157, 0.0
  %v222 = vmax.f32 %v162, 0.0
  %v223 = vmax.f32 %v165, 0.0
  %v224 = vmax.f32 %v170, 0.0
  %v225 = vmax.f32 %v173, 0.0
  %v226 = vmax.f32 %v178, 0.0
  %v227 = vmax.f32 %v181, 0.0
  %v228 = vmax.f32 %v186, 0.0
  %v229 = vmax.f32 %v189, 0.0
  %v230 = vmax.f32 %v194, 0.0
  %v231 = vmax.f32 %v197, 0.0
  %v232 = vmax.f32 %v202, 0.0
  %v233 = vmax.f32 %v205, 0.0
  %v234 = vmax.f32 %v210, 0.0
  %v235 = vmax.f32 %v213, 0.0
  %v236 = vpack.c.bf16 %v217, %v216
  %v237 = vpack.c.bf16 %v219, %v218
  %v238 = vpack.c.bf16 %v221, %v220
  %v239 = vpack.c.bf16 %v223, %v222
  %v240 = vpack.c.bf16 %v225, %v224
  %v241 = vpack.c.bf16 %v227, %v226
  %v242 = vpack.c.bf16 %v229, %v228
  %v243 = vpack.c.bf16 %v231, %v230
  %v244 = vpack.c.bf16 %v233, %v232
  %v245 = vpack.c.bf16 %v235, %v234
  %v246 = vld [vmem:[%s3] sm:$0xf]
  %v247 = vld [vmem:[%s3 + $0x4] sm:$0xf]
  %v248 = vld [vmem:[%s3 + $0x8] sm:$0xf]
  %v249 = vld [vmem:[%s3 + $0xc] sm:$0xf]
  %v250 = vld [vmem:[%s3 + $0x10] sm:$0xf]
  %v251 = vld [vmem:[%s3 + $0x14] sm:$0xf]
  %v252 = vld [vmem:[%s3 + $0x18] sm:$0xf]
  %v253 = vld [vmem:[%s3 + $0x1c] sm:$0xf]
  %v254 = vld [vmem:[%s3 + $0x20] sm:$0xf]
  %v255 = vld [vmem:[%s3 + $0x24] sm:$0xf]
  %v256 = vld [vmem:[%s3 + $0x28] sm:$0xf]
  %v257 = vld [vmem:[%s3 + $0x2c] sm:$0xf]
  %v258 = vld [vmem:[%s3 + $0x30] sm:$0xf]
  %v259 = vld [vmem:[%s3 + $0x34] sm:$0xf]
  %v260 = vld [vmem:[%s3 + $0x38] sm:$0xf]
  %v261 = vld [vmem:[%s3 + $0x3c] sm:$0xf]
  %v262 = vld [vmem:[%s4] sm:$0x1]
  %v264 = vlaneseq
  %v265 = vshrl.u32 %v264, 7
  %v266 = vsub.s32 0, %v265
  %v267 = vrot.slane %v262, %v266
  %v285 = vunpack.c.l.b16 %v246
  %v286 = vunpack.c.l.b16 %v247
  %v287 = vunpack.c.l.b16 %v248
  %v288 = vunpack.c.l.b16 %v249
  %v289 = vunpack.c.l.b16 %v250
  %v290 = vunpack.c.l.b16 %v251
  %v291 = vunpack.c.l.b16 %v252
  %v292 = vunpack.c.l.b16 %v253
  %v293 = vunpack.c.l.b16 %v254
  %v294 = vunpack.c.l.b16 %v255
  %v295 = vunpack.c.l.b16 %v256
  %v296 = vunpack.c.l.b16 %v257
  %v297 = vunpack.c.l.b16 %v258
  %v298 = vunpack.c.l.b16 %v259
  %v299 = vunpack.c.l.b16 %v260
  %v300 = vunpack.c.l.b16 %v261
  %v301 = vpack.c.b16 %v286, %v285
  %v302 = vpack.c.b16 %v288, %v287
  %v303 = vpack.c.b16 %v290, %v289
  %v304 = vpack.c.b16 %v292, %v291
  %v305 = vpack.c.b16 %v294, %v293
  %v306 = vpack.c.b16 %v296, %v295
  %v307 = vpack.c.b16 %v298, %v297
  %v308 = vpack.c.b16 %v300, %v299
  %317 = vmatprep.subr.bf16.mxu0 0
  %318 = vmatpush1.bf16.msra.mxu0 %v301
  %319 = vmatprep.subr.bf16.mxu0 0
  %320 = vmatpush1.bf16.msra.mxu0 %v302
  %321 = vmatprep.subr.bf16.mxu0 0
  %322 = vmatpush1.bf16.msra.mxu0 %v303
  %323 = vmatprep.subr.bf16.mxu0 0
  %324 = vmatpush1.bf16.msra.mxu0 %v304
  %325 = vmatprep.subr.bf16.mxu0 0
  %326 = vmatpush1.bf16.msra.mxu0 %v305
  %327 = vmatprep.subr.bf16.mxu0 0
  %328 = vmatpush1.bf16.msra.mxu0 %v306
  %329 = vmatprep.subr.bf16.mxu0 0
  %330 = vmatpush1.bf16.msra.mxu0 %v307
  %331 = vmatprep.subr.bf16.mxu0 0
  %332 = vmatpush1.bf16.msra.mxu0 %v308
  %333 = vmatprep.subr.bf16.mxu0 0
  %334 = vmatpush1.bf16.msra.mxu0 0
  %335 = vmatprep.subr.bf16.mxu0 0
  %336 = vmatpush1.bf16.msra.mxu0 0
  %337 = vmatprep.subr.bf16.mxu0 0
  %338 = vmatpush1.bf16.msra.mxu0 0
  %339 = vmatprep.subr.bf16.mxu0 0
  %340 = vmatpush1.bf16.msra.mxu0 0
  %341 = vmatprep.subr.bf16.mxu0 0
  %342 = vmatpush1.bf16.msra.mxu0 0
  %343 = vmatprep.subr.bf16.mxu0 0
  %344 = vmatpush1.bf16.msra.mxu0 0
  %345 = vmatprep.subr.bf16.mxu0 0
  %346 = vmatpush1.bf16.msra.mxu0 0
  %347 = vmatprep.subr.bf16.mxu0 0
  %348 = vmatpush1.bf16.msra.mxu0 0
  %349 = vmatprep.mubr.bf16.mxu0 0
  %350 = vmatmul.mubr.bf16.gmra.mrb[0].mxu0 %v236
  %v351 = vpop.f32.mrb[0].mxu0
  %v352 = vadd.f32 %v267, %v351
  %v353 = vpop.f32.mrb[0].mxu0
  %v354 = vpop.f32.mrb[0].mxu0
  %v355 = vadd.f32 %v267, %v354
  %v356 = vpop.f32.mrb[0].mxu0
  %357 = vmatprep.mubr.bf16.mxu0 0
  %358 = vmatmul.mubr.bf16.gmra.mrb[0].mxu0 %v237
  %v359 = vpop.f32.mrb[0].mxu0
  %v360 = vadd.f32 %v267, %v359
  %v361 = vpop.f32.mrb[0].mxu0
  %v362 = vpop.f32.mrb[0].mxu0
  %v363 = vadd.f32 %v267, %v362
  %v364 = vpop.f32.mrb[0].mxu0
  %365 = vmatprep.mubr.bf16.mxu0 0
  %366 = vmatmul.mubr.bf16.gmra.mrb[0].mxu0 %v238
  %v367 = vpop.f32.mrb[0].mxu0
  %v368 = vadd.f32 %v267, %v367
  %v369 = vpop.f32.mrb[0].mxu0
  %v370 = vpop.f32.mrb[0].mxu0
  %v371 = vadd.f32 %v267, %v370
  %v372 = vpop.f32.mrb[0].mxu0
  %373 = vmatprep.mubr.bf16.mxu0 0
  %374 = vmatmul.mubr.bf16.gmra.mrb[0].mxu0 %v239
  %v375 = vpop.f32.mrb[0].mxu0
  %v376 = vadd.f32 %v267, %v375
  %v377 = vpop.f32.mrb[0].mxu0
  %v378 = vpop.f32.mrb[0].mxu0
  %v379 = vadd.f32 %v267, %v378
  %v380 = vpop.f32.mrb[0].mxu0
  %381 = vmatprep.mubr.bf16.mxu0 0
  %382 = vmatmul.mubr.bf16.gmra.mrb[0].mxu0 %v240
  %v383 = vpop.f32.mrb[0].mxu0
  %v384 = vadd.f32 %v267, %v383
  %v385 = vpop.f32.mrb[0].mxu0
  %v386 = vpop.f32.mrb[0].mxu0
  %v387 = vadd.f32 %v267, %v386
  %v388 = vpop.f32.mrb[0].mxu0
  %389 = vmatprep.mubr.bf16.mxu0 0
  %390 = vmatmul.mubr.bf16.gmra.mrb[0].mxu0 %v241
  %v391 = vpop.f32.mrb[0].mxu0
  %v392 = vadd.f32 %v267, %v391
  %v393 = vpop.f32.mrb[0].mxu0
  %v394 = vpop.f32.mrb[0].mxu0
  %v395 = vadd.f32 %v267, %v394
  %v396 = vpop.f32.mrb[0].mxu0
  %397 = vmatprep.mubr.bf16.mxu0 0
  %398 = vmatmul.mubr.bf16.gmra.mrb[0].mxu0 %v242
  %v399 = vpop.f32.mrb[0].mxu0
  %v400 = vadd.f32 %v267, %v399
  %v401 = vpop.f32.mrb[0].mxu0
  %v402 = vpop.f32.mrb[0].mxu0
  %v403 = vadd.f32 %v267, %v402
  %v404 = vpop.f32.mrb[0].mxu0
  %405 = vmatprep.mubr.bf16.mxu0 0
  %406 = vmatmul.mubr.bf16.gmra.mrb[0].mxu0 %v243
  %v407 = vpop.f32.mrb[0].mxu0
  %v408 = vadd.f32 %v267, %v407
  %v409 = vpop.f32.mrb[0].mxu0
  %v410 = vpop.f32.mrb[0].mxu0
  %v411 = vadd.f32 %v267, %v410
  %v412 = vpop.f32.mrb[0].mxu0
  %413 = vmatprep.mubr.bf16.mxu0 0
  %414 = vmatmul.mubr.bf16.gmra.mrb[0].mxu0 %v244
  %v415 = vpop.f32.mrb[0].mxu0
  %v416 = vadd.f32 %v267, %v415
  %v417 = vpop.f32.mrb[0].mxu0
  %v418 = vpop.f32.mrb[0].mxu0
  %v419 = vadd.f32 %v267, %v418
  %v420 = vpop.f32.mrb[0].mxu0
  %421 = vmatprep.mubr.bf16.mxu0 0
  %422 = vmatmul.mubr.bf16.gmra.mrb[0].mxu0 %v245
  %v423 = vpop.f32.mrb[0].mxu0
  %v424 = vadd.f32 %v267, %v423
  %v425 = vpop.f32.mrb[0].mxu0
  %v426 = vpop.f32.mrb[0].mxu0
  %v427 = vadd.f32 %v267, %v426
  %v428 = vpop.f32.mrb[0].mxu0
  %429 = vdwg.mxu0
  %v430 = vmax.f32 %v352, 0.0
  %v431 = vmax.f32 %v355, 0.0
  %v432 = vmax.f32 %v360, 0.0
  %v433 = vmax.f32 %v363, 0.0
  %v434 = vmax.f32 %v368, 0.0
  %v435 = vmax.f32 %v371, 0.0
  %v436 = vmax.f32 %v376, 0.0
  %v437 = vmax.f32 %v379, 0.0
  %v438 = vmax.f32 %v384, 0.0
  %v439 = vmax.f32 %v387, 0.0
  %v440 = vmax.f32 %v392, 0.0
  %v441 = vmax.f32 %v395, 0.0
  %v442 = vmax.f32 %v400, 0.0
  %v443 = vmax.f32 %v403, 0.0
  %v444 = vmax.f32 %v408, 0.0
  %v445 = vmax.f32 %v411, 0.0
  %v446 = vmax.f32 %v416, 0.0
  %v447 = vmax.f32 %v419, 0.0
  %v448 = vmax.f32 %v424, 0.0
  %v449 = vmax.f32 %v427, 0.0
  %v450 = vpack.c.bf16 %v431, %v430
  %v451 = vpack.c.bf16 %v433, %v432
  %v452 = vpack.c.bf16 %v435, %v434
  %v453 = vpack.c.bf16 %v437, %v436
  %v454 = vpack.c.bf16 %v439, %v438
  %v455 = vpack.c.bf16 %v441, %v440
  %v456 = vpack.c.bf16 %v443, %v442
  %v457 = vpack.c.bf16 %v445, %v444
  %v458 = vpack.c.bf16 %v447, %v446
  %v459 = vpack.c.bf16 %v449, %v448
  %v460 = vld [vmem:[%s5] sm:$0xf]
  %v461 = vld [vmem:[%s5 + $0x4] sm:$0xf]
  %v462 = vld [vmem:[%s5 + $0x8] sm:$0xf]
  %v463 = vld [vmem:[%s5 + $0xc] sm:$0xf]
  %v464 = vld [vmem:[%s5 + $0x10] sm:$0xf]
  %v465 = vld [vmem:[%s5 + $0x14] sm:$0xf]
  %v466 = vld [vmem:[%s5 + $0x18] sm:$0xf]
  %v467 = vld [vmem:[%s5 + $0x1c] sm:$0xf]
  %v468 = vld [vmem:[%s5 + $0x20] sm:$0xf]
  %v469 = vld [vmem:[%s5 + $0x24] sm:$0xf]
  %v470 = vld [vmem:[%s5 + $0x28] sm:$0xf]
  %v471 = vld [vmem:[%s5 + $0x2c] sm:$0xf]
  %v472 = vld [vmem:[%s5 + $0x30] sm:$0xf]
  %v473 = vld [vmem:[%s5 + $0x34] sm:$0xf]
  %v474 = vld [vmem:[%s5 + $0x38] sm:$0xf]
  %v475 = vld [vmem:[%s5 + $0x3c] sm:$0xf]
  %v476 = vld [vmem:[%s6] sm:$0x1]
  %v478 = vlaneseq
  %v479 = vshrl.u32 %v478, 7
  %v480 = vsub.s32 0, %v479
  %v481 = vrot.slane %v476, %v480
  %v499 = vunpack.c.l.b16 %v460
  %v500 = vunpack.c.l.b16 %v461
  %v501 = vunpack.c.l.b16 %v462
  %v502 = vunpack.c.l.b16 %v463
  %v503 = vunpack.c.l.b16 %v464
  %v504 = vunpack.c.l.b16 %v465
  %v505 = vunpack.c.l.b16 %v466
  %v506 = vunpack.c.l.b16 %v467
  %v507 = vunpack.c.l.b16 %v468
  %v508 = vunpack.c.l.b16 %v469
  %v509 = vunpack.c.l.b16 %v470
  %v510 = vunpack.c.l.b16 %v471
  %v511 = vunpack.c.l.b16 %v472
  %v512 = vunpack.c.l.b16 %v473
  %v513 = vunpack.c.l.b16 %v474
  %v514 = vunpack.c.l.b16 %v475
  %v515 = vpack.c.b16 %v500, %v499
  %v516 = vpack.c.b16 %v502, %v501
  %v517 = vpack.c.b16 %v504, %v503
  %v518 = vpack.c.b16 %v506, %v505
  %v519 = vpack.c.b16 %v508, %v507
  %v520 = vpack.c.b16 %v510, %v509
  %v521 = vpack.c.b16 %v512, %v511
  %v522 = vpack.c.b16 %v514, %v513
  %531 = vmatprep.subr.bf16.mxu0 0
  %532 = vmatpush1.bf16.msra.mxu0 %v515
  %533 = vmatprep.subr.bf16.mxu0 0
  %534 = vmatpush1.bf16.msra.mxu0 %v516
  %535 = vmatprep.subr.bf16.mxu0 0
  %536 = vmatpush1.bf16.msra.mxu0 %v517
  %537 = vmatprep.subr.bf16.mxu0 0
  %538 = vmatpush1.bf16.msra.mxu0 %v518
  %539 = vmatprep.subr.bf16.mxu0 0
  %540 = vmatpush1.bf16.msra.mxu0 %v519
  %541 = vmatprep.subr.bf16.mxu0 0
  %542 = vmatpush1.bf16.msra.mxu0 %v520
  %543 = vmatprep.subr.bf16.mxu0 0
  %544 = vmatpush1.bf16.msra.mxu0 %v521
  %545 = vmatprep.subr.bf16.mxu0 0
  %546 = vmatpush1.bf16.msra.mxu0 %v522
  %547 = vmatprep.subr.bf16.mxu0 0
  %548 = vmatpush1.bf16.msra.mxu0 0
  %549 = vmatprep.subr.bf16.mxu0 0
  %550 = vmatpush1.bf16.msra.mxu0 0
  %551 = vmatprep.subr.bf16.mxu0 0
  %552 = vmatpush1.bf16.msra.mxu0 0
  %553 = vmatprep.subr.bf16.mxu0 0
  %554 = vmatpush1.bf16.msra.mxu0 0
  %555 = vmatprep.subr.bf16.mxu0 0
  %556 = vmatpush1.bf16.msra.mxu0 0
  %557 = vmatprep.subr.bf16.mxu0 0
  %558 = vmatpush1.bf16.msra.mxu0 0
  %559 = vmatprep.subr.bf16.mxu0 0
  %560 = vmatpush1.bf16.msra.mxu0 0
  %561 = vmatprep.subr.bf16.mxu0 0
  %562 = vmatpush1.bf16.msra.mxu0 0
  %563 = vmatprep.mubr.bf16.mxu0 0
  %564 = vmatmul.mubr.bf16.gmra.mrb[0].mxu0 %v450
  %v565 = vpop.f32.mrb[0].mxu0
  %v566 = vadd.f32 %v481, %v565
  %v567 = vpop.f32.mrb[0].mxu0
  %v568 = vpop.f32.mrb[0].mxu0
  %v569 = vadd.f32 %v481, %v568
  %v570 = vpop.f32.mrb[0].mxu0
  %571 = vmatprep.mubr.bf16.mxu0 0
  %572 = vmatmul.mubr.bf16.gmra.mrb[0].mxu0 %v451
  %v573 = vpop.f32.mrb[0].mxu0
  %v574 = vadd.f32 %v481, %v573
  %v575 = vpop.f32.mrb[0].mxu0
  %v576 = vpop.f32.mrb[0].mxu0
  %v577 = vadd.f32 %v481, %v576
  %v578 = vpop.f32.mrb[0].mxu0
  %579 = vmatprep.mubr.bf16.mxu0 0
  %580 = vmatmul.mubr.bf16.gmra.mrb[0].mxu0 %v452
  %v581 = vpop.f32.mrb[0].mxu0
  %v582 = vadd.f32 %v481, %v581
  %v583 = vpop.f32.mrb[0].mxu0
  %v584 = vpop.f32.mrb[0].mxu0
  %v585 = vadd.f32 %v481, %v584
  %v586 = vpop.f32.mrb[0].mxu0
  %587 = vmatprep.mubr.bf16.mxu0 0
  %588 = vmatmul.mubr.bf16.gmra.mrb[0].mxu0 %v453
  %v589 = vpop.f32.mrb[0].mxu0
  %v590 = vadd.f32 %v481, %v589
  %v591 = vpop.f32.mrb[0].mxu0
  %v592 = vpop.f32.mrb[0].mxu0
  %v593 = vadd.f32 %v481, %v592
  %v594 = vpop.f32.mrb[0].mxu0
  %595 = vmatprep.mubr.bf16.mxu0 0
  %596 = vmatmul.mubr.bf16.gmra.mrb[0].mxu0 %v454
  %v597 = vpop.f32.mrb[0].mxu0
  %v598 = vadd.f32 %v481, %v597
  %v599 = vpop.f32.mrb[0].mxu0
  %v600 = vpop.f32.mrb[0].mxu0
  %v601 = vadd.f32 %v481, %v600
  %v602 = vpop.f32.mrb[0].mxu0
  %603 = vmatprep.mubr.bf16.mxu0 0
  %604 = vmatmul.mubr.bf16.gmra.mrb[0].mxu0 %v455
  %v605 = vpop.f32.mrb[0].mxu0
  %v606 = vadd.f32 %v481, %v605
  %v607 = vpop.f32.mrb[0].mxu0
  %v608 = vpop.f32.mrb[0].mxu0
  %v609 = vadd.f32 %v481, %v608
  %v610 = vpop.f32.mrb[0].mxu0
  %611 = vmatprep.mubr.bf16.mxu0 0
  %612 = vmatmul.mubr.bf16.gmra.mrb[0].mxu0 %v456
  %v613 = vpop.f32.mrb[0].mxu0
  %v614 = vadd.f32 %v481, %v613
  %v615 = vpop.f32.mrb[0].mxu0
  %v616 = vpop.f32.mrb[0].mxu0
  %v617 = vadd.f32 %v481, %v616
  %v618 = vpop.f32.mrb[0].mxu0
  %619 = vmatprep.mubr.bf16.mxu0 0
  %620 = vmatmul.mubr.bf16.gmra.mrb[0].mxu0 %v457
  %v621 = vpop.f32.mrb[0].mxu0
  %v622 = vadd.f32 %v481, %v621
  %v623 = vpop.f32.mrb[0].mxu0
  %v624 = vpop.f32.mrb[0].mxu0
  %v625 = vadd.f32 %v481, %v624
  %v626 = vpop.f32.mrb[0].mxu0
  %627 = vmatprep.mubr.bf16.mxu0 0
  %628 = vmatmul.mubr.bf16.gmra.mrb[0].mxu0 %v458
  %v629 = vpop.f32.mrb[0].mxu0
  %v630 = vadd.f32 %v481, %v629
  %v631 = vpop.f32.mrb[0].mxu0
  %v632 = vpop.f32.mrb[0].mxu0
  %v633 = vadd.f32 %v481, %v632
  %v634 = vpop.f32.mrb[0].mxu0
  %635 = vmatprep.mubr.bf16.mxu0 0
  %636 = vmatmul.mubr.bf16.gmra.mrb[0].mxu0 %v459
  %v637 = vpop.f32.mrb[0].mxu0
  %v638 = vadd.f32 %v481, %v637
  %v639 = vpop.f32.mrb[0].mxu0
  %v640 = vpop.f32.mrb[0].mxu0
  %v641 = vadd.f32 %v481, %v640
  %v642 = vpop.f32.mrb[0].mxu0
  %643 = vdwg.mxu0
  %vm644 = vcmask 64512
  %645 = vst.msk [vmem:[%s7] sm:$0xff] %vm644, %v566
  %646 = vst.msk [vmem:[%s7 + $0x8] sm:$0xff] %vm644, %v569
  %647 = vst.msk [vmem:[%s7 + $0x10] sm:$0xff] %vm644, %v574
  %648 = vst.msk [vmem:[%s7 + $0x18] sm:$0xff] %vm644, %v577
  %649 = vst.msk [vmem:[%s7 + $0x20] sm:$0xff] %vm644, %v582
  %650 = vst.msk [vmem:[%s7 + $0x28] sm:$0xff] %vm644, %v585
  %651 = vst.msk [vmem:[%s7 + $0x30] sm:$0xff] %vm644, %v590
  %652 = vst.msk [vmem:[%s7 + $0x38] sm:$0xff] %vm644, %v593
  %653 = vst.msk [vmem:[%s7 + $0x40] sm:$0xff] %vm644, %v598
  %654 = vst.msk [vmem:[%s7 + $0x48] sm:$0xff] %vm644, %v601
  %655 = vst.msk [vmem:[%s7 + $0x50] sm:$0xff] %vm644, %v606
  %656 = vst.msk [vmem:[%s7 + $0x58] sm:$0xff] %vm644, %v609
  %657 = vst.msk [vmem:[%s7 + $0x60] sm:$0xff] %vm644, %v614
  %658 = vst.msk [vmem:[%s7 + $0x68] sm:$0xff] %vm644, %v617
  %659 = vst.msk [vmem:[%s7 + $0x70] sm:$0xff] %vm644, %v622
  %660 = vst.msk [vmem:[%s7 + $0x78] sm:$0xff] %vm644, %v625
  %661 = vst.msk [vmem:[%s7 + $0x80] sm:$0xff] %vm644, %v630
  %662 = vst.msk [vmem:[%s7 + $0x88] sm:$0xff] %vm644, %v633
  %663 = vst.msk [vmem:[%s7 + $0x90] sm:$0xff] %vm644, %v638
  %664 = vst.msk [vmem:[%s7 + $0x98] sm:$0xff] %vm644, %v641
  // Predicated region
  $region30: #{actor_critic_forward.1} parent=0 // pred_check
    _
  $region31: #{actor_critic_forward.1} parent=0 // pred_check_branch
    %666 = sbr.rel (0) target = $region33
  $region32: #{actor_critic_forward.1} parent=0 // pred_region
    _
  $region33: #{actor_critic_forward.1} parent=0 // pred_fallthru
    _
  // Predicated region
  $region34: #{actor_critic_forward.1} parent=0 // pred_check
    _
  $region35: #{actor_critic_forward.1} parent=0 // pred_check_branch
    %668 = sbr.rel (0) target = $region37
  $region36: #{actor_critic_forward.1} parent=0 // pred_region
    _
  $region37: #{actor_critic_forward.1} parent=0 // pred_fallthru
    _

</llo_original>
